<compile_context>
chip_gen: v7x
topology: tpu7x:2x2x1
jax: 0.10.0
libtpu: 0.0.40
codegen_flags: <defaults>
</compile_context>

<pallas_src>
import functools

import jax
import jax.numpy as jnp
from jax.experimental import pallas as pl
from jax.experimental.pallas import tpu as pltpu

_SUBLANE = 8                 # batch tiles are multiples of the sublane width
_DEF_TILE_B = 512            # default batch tile (large -> amortize per-step overhead)
_VMEM_HEADROOM = 8 << 20     # leave room for compiler-internal scratch

# Activations used inside the kernel (EUP/VPU friendly) ...
_ACT_KERNEL = {
    "tanh": jnp.tanh,
    "relu": lambda v: jnp.maximum(v, 0.0),
    # exp (EUP) + approximate reciprocal (EUP) instead of an exact divide sequence.
    "sigmoid": lambda v: pl.reciprocal(1.0 + jnp.exp(-v), approx=True),
}
# ... and their pure-JAX counterparts for the reference path.
_ACT_REF = {
    "tanh": jnp.tanh,
    "relu": lambda v: jnp.maximum(v, 0.0),
    "sigmoid": jax.nn.sigmoid,
}
# TODO(synk): remaining pfbayes NONLINEARITIES (softplus, elu, swish, ...) are not wired up.


def _round_up(n, m):
    return ((n + m - 1) // m) * m


def _vmem_budget_bytes():
    """Per-generation VMEM cap minus headroom (128 MiB on v5e/v6e, 64 MiB on v7x)."""
    try:
        cap = pltpu.get_tpu_info().vmem_capacity_bytes
    except Exception:   # conservative fallback works on every generation
        cap = 64 << 20
    return cap - _VMEM_HEADROOM


def _resident_param_spec(shape):
    """Whole-array VMEM-resident parameter: constant index_map + single-buffered."""
    zero_map = lambda i: (0,) * len(shape)
    try:
        return pl.BlockSpec(shape, zero_map, pipeline_mode=pl.Buffered(1))
    except TypeError:   # older JAX without pipeline_mode: fall back to default buffering
        return pl.BlockSpec(shape, zero_map)


def _estimate_vmem_bytes(tile_b, din, out_dim, params, act_itemsize, io_itemsize):
    """Single-buffered params + double-buffered x/out tiles + the largest live
    intermediate counted once (layers run sequentially)."""
    param_bytes = sum(w.size * w.dtype.itemsize + b.size * b.dtype.itemsize
                      for w, b in params)
    max_w = max([din, out_dim] + [w.shape[1] for w, _ in params])
    per_tile = (2 * tile_b * din * io_itemsize            # double-buffered input tile
                + 2 * tile_b * out_dim * io_itemsize      # double-buffered output tile
                + tile_b * max_w * 4                      # f32 accumulator / activation
                + tile_b * max_w * act_itemsize)          # matmul-dtype live intermediate
    return param_bytes + per_tile


# ---------------------------------------------------------------------------
# Fused kernel: y = act_{L-1}(... act_0(x @ W0 + b0) ... @ W_{L-1} + b_{L-1})
# ---------------------------------------------------------------------------
def _mlp_fused_kernel(x_ref, *refs, n_layers, acts, matmul_dtype):
    """refs = (w0, b0, w1, b1, ..., w_{L-1}, b_{L-1}, o_ref).

    Weights arrive pre-cast to matmul_dtype (no in-kernel weight casts); biases are
    f32 and added after the f32 MXU accumulate.  The layer loop is unrolled at trace
    time; every intermediate stays in VMEM / vregs.
    """
    o_ref = refs[-1]
    h = x_ref[...].astype(matmul_dtype)                          # cast once per tile
    for l in range(n_layers):
        w = refs[2 * l][...]                                     # (K, N), matmul_dtype
        b = refs[2 * l + 1][...]                                 # (1, N), f32
        y = jnp.dot(h, w, preferred_element_type=jnp.float32)    # MXU, f32 accumulate
        y = y + b                                                # VPU bias add (broadcast)
        act = acts[l]
        if act is not None:
            y = _ACT_KERNEL[act](y)                              # EUP/VPU nonlinearity
        h = y.astype(matmul_dtype) if l + 1 < n_layers else y    # carry h narrow
    o_ref[...] = h.astype(o_ref.dtype)


@functools.partial(jax.jit, static_argnames=("acts", "tile_b"))
def _mlp_apply(x, params, acts, tile_b):
    """Pad batch -> fused pallas_call over batch tiles -> slice, all under one jit
    so XLA fuses the pad/slice copies with the kernel's input/output."""
    B, din = x.shape
    n_layers = len(params)
    out_dim = params[-1][0].shape[1]
    matmul_dtype = params[0][0].dtype
    io_itemsize = x.dtype.itemsize
    act_itemsize = matmul_dtype.itemsize
    budget = _vmem_budget_bytes()

    # Resident-weight guard: this kernel keeps every (W, b) VMEM-resident.
    param_bytes = sum(w.size * w.dtype.itemsize + b.size * b.dtype.itemsize
                      for w, b in params)
    if param_bytes > 0.6 * budget:
        # TODO(synk): for very wide MLPs, tile the widest layer's output-feature (N)
        # dim on a second grid axis (or pipeline the weights with a non-constant
        # index_map) instead of keeping all weights resident.
        raise NotImplementedError("MLP weights too large to keep VMEM-resident on this TPU")

    # ---- batch-tile selection --------------------------------------------------
    b8 = _round_up(B, _SUBLANE)
    tb = min(tile_b, b8)
    if b8 >= 2 * _SUBLANE:
        # ensure >= 2 grid steps so both v7x TensorCores get work
        tb = min(tb, max(_SUBLANE, (b8 // 2) // _SUBLANE * _SUBLANE))
    while tb > _SUBLANE and _estimate_vmem_bytes(
            tb, din, out_dim, params, act_itemsize, io_itemsize) > budget:
        tb = max(_SUBLANE, _round_up(tb // 2, _SUBLANE))
    b_pad = _round_up(b8, tb)

    x_p = x if b_pad == B else jnp.zeros((b_pad, din), x.dtype).at[:B].set(x)

    # ---- specs: activations tiled over batch, params whole-array resident -------
    in_specs = [pl.BlockSpec((tb, din), lambda i: (i, 0))]
    flat_inputs = [x_p]
    for w, b in params:
        in_specs.append(_resident_param_spec(w.shape))
        in_specs.append(_resident_param_spec(b.shape))
        flat_inputs += [w, b]
    out_specs = pl.BlockSpec((tb, out_dim), lambda i: (i, 0))

    est = _estimate_vmem_bytes(tb, din, out_dim, params, act_itemsize, io_itemsize)
    vmem_limit = int(min(budget, max(est + (8 << 20), 32 << 20)))

    flops = 2 * b_pad * sum(w.shape[0] * w.shape[1] for w, _ in params)
    transcendentals = b_pad * sum(w.shape[1] for (w, _), a in zip(params, acts)
                                  if a in ("tanh", "sigmoid"))
    bytes_accessed = int(x_p.size * io_itemsize + param_bytes
                         + b_pad * out_dim * io_itemsize)

    kernel = functools.partial(_mlp_fused_kernel, n_layers=n_layers, acts=acts,
                               matmul_dtype=matmul_dtype)

    out_p = pl.pallas_call(
        kernel,
        out_shape=jax.ShapeDtypeStruct((b_pad, out_dim), x.dtype),
        grid=(b_pad // tb,),
        in_specs=in_specs,
        out_specs=out_specs,
        compiler_params=pltpu.CompilerParams(
            dimension_semantics=("parallel",),    # batch tiles independent -> 2-TC sharding
            vmem_limit_bytes=vmem_limit),
        cost_estimate=pl.CostEstimate(flops=int(flops),
                                      transcendentals=int(transcendentals),
                                      bytes_accessed=bytes_accessed),
    )(*flat_inputs)

    return out_p if b_pad == B else out_p[:B]


# ---------------------------------------------------------------------------
# MLP wrapper (mirrors the PyTorch module's forward, including act_last)
# ---------------------------------------------------------------------------
class MLP:
    """hidden_dims as '-'-separated string; nonlinearity / act_last from _ACT_KERNEL."""

    def __init__(self, input_dim, hidden_dims, nonlinearity="tanh", act_last=None,
                 key=None, matmul_dtype=jnp.bfloat16):
        assert nonlinearity in _ACT_KERNEL, f"unsupported nonlinearity {nonlinearity}"
        assert act_last is None or act_last in _ACT_KERNEL, f"unsupported act_last {act_last}"
        self.input_dim = input_dim
        self.act_last = act_last
        self.matmul_dtype = matmul_dtype   # bf16 default: MXU-native, f32 accumulation

        dims = tuple(map(int, hidden_dims.split("-")))
        n = len(dims)
        # Per-layer activation, matching the torch forward exactly:
        #   applied iff (l + 1 < n) or act_last is not None;
        #   the last layer uses act_last when given, else the shared nonlinearity.
        acts = []
        for l in range(n):
            if l + 1 < n:
                acts.append(nonlinearity)
            elif act_last is not None:
                acts.append(act_last)
            else:
                acts.append(None)
        self.acts = tuple(acts)

        key = key if key is not None else jax.random.PRNGKey(0)
        self.params = []            # f32 master copies (pure-JAX reference path)
        params_compute = []         # kernel copies: W pre-cast to matmul_dtype, bias f32 (1, h)
        prev = input_dim
        for h in dims:
            key, kw, kb = jax.random.split(key, 3)
            scale = (2.0 / (prev + h)) ** 0.5      # xavier-style (as in pfbayes weights_init)
            w = scale * jax.random.normal(kw, (prev, h), dtype=jnp.float32)
            b = 0.01 * jax.random.normal(kb, (h,), dtype=jnp.float32)
            self.params.append((w, b))
            params_compute.append((w.astype(matmul_dtype), b.reshape(1, h)))
            prev = h
        self.params_compute = tuple(params_compute)
        self.output_size = prev

    def __call__(self, x, tile_b=_DEF_TILE_B):
        assert x.shape[-1] == self.input_dim
        return _mlp_apply(x, self.params_compute, self.acts, tile_b)

    # pure-JAX reference (f32 params) for correctness checking
    def reference(self, x):
        for l, (w, b) in enumerate(self.params):
            x = x @ w + b
            if self.acts[l] is not None:
                x = _ACT_REF[self.acts[l]](x)
        return x


if __name__ == "__main__":
    key = jax.random.PRNGKey(0)
    kx, kx2, kp = jax.random.split(key, 3)

    batch, input_dim = 8, 16
    x = jax.random.normal(kx, (batch, input_dim), dtype=jnp.float32)

    # 1) f32 matmul path: tight numerics vs the pure-JAX reference.
    mlp_f32 = MLP(input_dim=input_dim, hidden_dims="32-32-8",
                  nonlinearity="tanh", act_last=None, key=kp,
                  matmul_dtype=jnp.float32)
    out32 = jax.block_until_ready(mlp_f32(x))
    ref32 = mlp_f32.reference(x)
    assert out32.shape == (batch, mlp_f32.output_size)
    assert jnp.allclose(out32, ref32, atol=1e-5, rtol=1e-5), "f32 mismatch vs reference"

    # 2) default bf16-matmul (f32 accumulate) path: loose tolerance vs f32 reference.
    mlp_bf16 = MLP(input_dim=input_dim, hidden_dims="32-32-8",
                   nonlinearity="tanh", act_last=None, key=kp)
    out16 = jax.block_until_ready(mlp_bf16(x))
    ref16 = mlp_bf16.reference(x)
    assert out16.shape == (batch, mlp_bf16.output_size)
    assert jnp.allclose(out16, ref16, atol=5e-2, rtol=5e-2), "bf16 mismatch vs reference"

    # 3) non-multiple-of-8 batch exercises batch padding + multi-tile grid + slice.
    x_big = jax.random.normal(kx2, (50, input_dim), dtype=jnp.float32)
    out_big = jax.block_until_ready(mlp_bf16(x_big))
    ref_big = mlp_bf16.reference(x_big)
    assert out_big.shape == (50, mlp_bf16.output_size)
    assert jnp.allclose(out_big, ref_big, atol=5e-2, rtol=5e-2), "padded-batch mismatch"

    print("KERNEL_OK")
</pallas_src>

<mosaic_0001>
module attributes {stable_mosaic.version = 11 : i64} {
  func.func @_mlp_fused_kernel(%arg0: i32, %arg1: memref<8x16xf32, #tpu.memory_space<vmem>>, %arg2: memref<16x32xf32, #tpu.memory_space<vmem>>, %arg3: memref<1x32xf32, #tpu.memory_space<vmem>>, %arg4: memref<32x32xf32, #tpu.memory_space<vmem>>, %arg5: memref<1x32xf32, #tpu.memory_space<vmem>>, %arg6: memref<32x8xf32, #tpu.memory_space<vmem>>, %arg7: memref<1x8xf32, #tpu.memory_space<vmem>>, %arg8: memref<8x8xf32, #tpu.memory_space<vmem>>) attributes {dimension_semantics = [#tpu.dimension_semantics<parallel>], iteration_bounds = array<i64: 1>, scalar_prefetch = 0 : i64, scratch_operands = 0 : i64, tpu.core_type = #tpu.core_type<tc>, window_params = [{transform_indices = @transform_0, window_bounds = array<i64: 8, 16>}, {pipeline_mode = #tpu.pipeline_mode<synchronous>, transform_indices = @transform_1, window_bounds = array<i64: 16, 32>}, {pipeline_mode = #tpu.pipeline_mode<synchronous>, transform_indices = @transform_2, window_bounds = array<i64: 1, 32>}, {pipeline_mode = #tpu.pipeline_mode<synchronous>, transform_indices = @transform_3, window_bounds = array<i64: 32, 32>}, {pipeline_mode = #tpu.pipeline_mode<synchronous>, transform_indices = @transform_4, window_bounds = array<i64: 1, 32>}, {pipeline_mode = #tpu.pipeline_mode<synchronous>, transform_indices = @transform_5, window_bounds = array<i64: 32, 8>}, {pipeline_mode = #tpu.pipeline_mode<synchronous>, transform_indices = @transform_6, window_bounds = array<i64: 1, 8>}, {transform_indices = @transform_7, window_bounds = array<i64: 8, 8>}]} {
    %c0 = arith.constant 0 : index
    %c0_0 = arith.constant 0 : index
    %0 = vector.load %arg1[%c0, %c0_0] : memref<8x16xf32, #tpu.memory_space<vmem>>, vector<8x16xf32>
    %c0_1 = arith.constant 0 : index
    %c0_2 = arith.constant 0 : index
    %1 = vector.load %arg2[%c0_1, %c0_2] : memref<16x32xf32, #tpu.memory_space<vmem>>, vector<16x32xf32>
    %c0_3 = arith.constant 0 : index
    %c0_4 = arith.constant 0 : index
    %2 = vector.load %arg3[%c0_3, %c0_4] : memref<1x32xf32, #tpu.memory_space<vmem>>, vector<1x32xf32>
    %cst = arith.constant dense<0.000000e+00> : vector<8x32xf32>
    %3 = tpu.matmul %0, %1, %cst {dimension_numbers = #tpu.dot_dimension_numbers<[1], [0], [0], [1], [0, 0, 1, 1], [], []>} : vector<8x16xf32>, vector<16x32xf32>, vector<8x32xf32> -> vector<8x32xf32>
    %4 = vector.broadcast %2 : vector<1x32xf32> to vector<8x32xf32>
    %5 = arith.addf %3, %4 : vector<8x32xf32>
    %6 = math.tanh %5 : vector<8x32xf32>
    %c0_5 = arith.constant 0 : index
    %c0_6 = arith.constant 0 : index
    %7 = vector.load %arg4[%c0_5, %c0_6] : memref<32x32xf32, #tpu.memory_space<vmem>>, vector<32x32xf32>
    %c0_7 = arith.constant 0 : index
    %c0_8 = arith.constant 0 : index
    %8 = vector.load %arg5[%c0_7, %c0_8] : memref<1x32xf32, #tpu.memory_space<vmem>>, vector<1x32xf32>
    %cst_9 = arith.constant dense<0.000000e+00> : vector<8x32xf32>
    %9 = tpu.matmul %6, %7, %cst_9 {dimension_numbers = #tpu.dot_dimension_numbers<[1], [0], [0], [1], [0, 0, 1, 1], [], []>} : vector<8x32xf32>, vector<32x32xf32>, vector<8x32xf32> -> vector<8x32xf32>
    %10 = vector.broadcast %8 : vector<1x32xf32> to vector<8x32xf32>
    %11 = arith.addf %9, %10 : vector<8x32xf32>
    %12 = math.tanh %11 : vector<8x32xf32>
    %c0_10 = arith.constant 0 : index
    %c0_11 = arith.constant 0 : index
    %13 = vector.load %arg6[%c0_10, %c0_11] : memref<32x8xf32, #tpu.memory_space<vmem>>, vector<32x8xf32>
    %c0_12 = arith.constant 0 : index
    %c0_13 = arith.constant 0 : index
    %14 = vector.load %arg7[%c0_12, %c0_13] : memref<1x8xf32, #tpu.memory_space<vmem>>, vector<1x8xf32>
    %cst_14 = arith.constant dense<0.000000e+00> : vector<8x8xf32>
    %15 = tpu.matmul %12, %13, %cst_14 {dimension_numbers = #tpu.dot_dimension_numbers<[1], [0], [0], [1], [0, 0, 1, 1], [], []>} : vector<8x32xf32>, vector<32x8xf32>, vector<8x8xf32> -> vector<8x8xf32>
    %16 = vector.broadcast %14 : vector<1x8xf32> to vector<8x8xf32>
    %17 = arith.addf %15, %16 : vector<8x8xf32>
    %c0_15 = arith.constant 0 : index
    %c0_16 = arith.constant 0 : index
    %18 = vector.load %arg8[%c0_15, %c0_16] : memref<8x8xf32, #tpu.memory_space<vmem>>, vector<8x8xf32>
    tpu.vector_store %arg8[%c0_15, %c0_16], %17 {strides = array<i32>} : memref<8x8xf32, #tpu.memory_space<vmem>>, vector<8x8xf32>,
    return
  }
  func.func @transform_0(%arg0: i32) -> (i32, i32) {
    %c0_i32 = arith.constant 0 : i32
    %c0_i32_0 = arith.constant 0 : i32
    return %arg0, %c0_i32 : i32, i32
  }
  func.func @transform_1(%arg0: i32) -> (i32, i32) {
    %c0_i32 = arith.constant 0 : i32
    %c0_i32_0 = arith.constant 0 : i32
    %c0_i32_1 = arith.constant 0 : i32
    return %c0_i32, %c0_i32_0 : i32, i32
  }
  func.func @transform_2(%arg0: i32) -> (i32, i32) {
    %c0_i32 = arith.constant 0 : i32
    %c0_i32_0 = arith.constant 0 : i32
    %c0_i32_1 = arith.constant 0 : i32
    return %c0_i32, %c0_i32_0 : i32, i32
  }
  func.func @transform_3(%arg0: i32) -> (i32, i32) {
    %c0_i32 = arith.constant 0 : i32
    %c0_i32_0 = arith.constant 0 : i32
    %c0_i32_1 = arith.constant 0 : i32
    return %c0_i32, %c0_i32_0 : i32, i32
  }
  func.func @transform_4(%arg0: i32) -> (i32, i32) {
    %c0_i32 = arith.constant 0 : i32
    %c0_i32_0 = arith.constant 0 : i32
    %c0_i32_1 = arith.constant 0 : i32
    return %c0_i32, %c0_i32_0 : i32, i32
  }
  func.func @transform_5(%arg0: i32) -> (i32, i32) {
    %c0_i32 = arith.constant 0 : i32
    %c0_i32_0 = arith.constant 0 : i32
    %c0_i32_1 = arith.constant 0 : i32
    return %c0_i32, %c0_i32_0 : i32, i32
  }
  func.func @transform_6(%arg0: i32) -> (i32, i32) {
    %c0_i32 = arith.constant 0 : i32
    %c0_i32_0 = arith.constant 0 : i32
    %c0_i32_1 = arith.constant 0 : i32
    return %c0_i32, %c0_i32_0 : i32, i32
  }
  func.func @transform_7(%arg0: i32) -> (i32, i32) {
    %c0_i32 = arith.constant 0 : i32
    %c0_i32_0 = arith.constant 0 : i32
    return %arg0, %c0_i32 : i32, i32
  }
}

</mosaic_0001>

<llo_original>
// kernel: _mlp_apply.1
$region0: #{_mlp_apply.1}
  #allocation0 [shape = 'u32[]', space=smem, size = 0x4, offset = 0x4, fixed_abs, tag = 'smem constant byte address 0x4 - core index']
  #allocation1 [shape = 'u32[144,128]{1,0:T(1,128)}', space=vmem, size = 0x12000, scoped, tag = 'internal scratch']
  %s0 = inlined_call_operand.hbm [shape: f32[8,16], index: 0, kind: input, shape index: {}]
  %s1 = inlined_call_operand.vmem [shape: f32[16,32], index: 1, kind: input, shape index: {}]
  %s2 = inlined_call_operand.vmem [shape: f32[1,32], index: 2, kind: input, shape index: {}]
  %s3 = inlined_call_operand.vmem [shape: f32[32,32], index: 3, kind: input, shape index: {}]
  %s4 = inlined_call_operand.vmem [shape: f32[1,32], index: 4, kind: input, shape index: {}]
  %s5 = inlined_call_operand.vmem [shape: f32[32,8], index: 5, kind: input, shape index: {}]
  %s6 = inlined_call_operand.vmem [shape: f32[1,8], index: 6, kind: input, shape index: {}]
  %s7 = inlined_call_operand.hbm [shape: f32[8,8], index: 7, kind: output, shape index: {}]
  %s8 = sld [smem:[#allocation0]]
  $region42: #{_mlp_apply.1} parent=0
    _
  %s10 = ssub.s32 1, %s8
  %s11 = scalar_select 0, %s10, %s8
  $region1: #{_mlp_apply.1} parent=0
    #allocation2 [shape = 'u8[4096]{0}', space=vmem, size = 0x1000, scoped, tag = 'input window, operand 0, single buffered']
    #allocation3 [shape = 's32[1]{0}', space=sflag, size = 0x4, scoped, tag = 'scoped memory for _mlp_apply.1']
    #allocation4 [shape = 's32[1]{0}', space=sflag, size = 0x4, scoped, tag = 'scoped memory for _mlp_apply.1']
    #allocation5 [shape = 'u8[4096]{0}', space=vmem, size = 0x1000, scoped, tag = 'output window, operand 0, single buffered']
    %12 = vsyncpa [#allocation3], 0
    %13 = vsyncpa [#allocation4], 0
    // Predicated region
    $region2: #{_mlp_apply.1} parent=1 // pred_check
      _
    $region3: #{_mlp_apply.1} parent=1 // pred_check_branch
      %15 = sbr.rel (0) target = $region5
    $region4: #{_mlp_apply.1} parent=1 // pred_region
      %s17 = ssub.s32 128, 128
      %18 = vsyncadd [#allocation3], %s17
      %s20 = sshll.u32 [#allocation2], 4
      %s21 = int_to_ptr.vmem [resolvable:$true] %s20
      %23 = dma.hbm_to_vmem [thread:$0]  %s0, 128, %s21, [#allocation3]
    $region5: #{_mlp_apply.1} parent=1 // pred_fallthru
      _
    // Predicated region
    $region6: #{_mlp_apply.1} parent=1 // pred_check
      _
    $region7: #{_mlp_apply.1} parent=1 // pred_check_branch
      %25 = sbr.rel (0) target = $region9
    $region8: #{_mlp_apply.1} parent=1 // pred_region
      _
    $region9: #{_mlp_apply.1} parent=1 // pred_fallthru
      _
    // Predicated region
    $region10: #{_mlp_apply.1} parent=1 // pred_check
      _
    $region11: #{_mlp_apply.1} parent=1 // pred_check_branch
      %27 = sbr.rel (0) target = $region13
    $region12: #{_mlp_apply.1} parent=1 // pred_region
      _
    $region13: #{_mlp_apply.1} parent=1 // pred_fallthru
      _
    // Predicated region
    $region14: #{_mlp_apply.1} parent=1 // pred_check
      _
    $region15: #{_mlp_apply.1} parent=1 // pred_check_branch
      %29 = sbr.rel (0) target = $region17
    $region16: #{_mlp_apply.1} parent=1 // pred_region
      _
    $region17: #{_mlp_apply.1} parent=1 // pred_fallthru
      _
    // Predicated region
    $region18: #{_mlp_apply.1} parent=1 // pred_check
      _
    $region19: #{_mlp_apply.1} parent=1 // pred_check_branch
      %31 = sbr.rel (0) target = $region21
    $region20: #{_mlp_apply.1} parent=1 // pred_region
      _
    $region21: #{_mlp_apply.1} parent=1 // pred_fallthru
      _
    // Predicated region
    $region22: #{_mlp_apply.1} parent=1 // pred_check
      _
    $region23: #{_mlp_apply.1} parent=1 // pred_check_branch
      %33 = sbr.rel (0) target = $region25
    $region24: #{_mlp_apply.1} parent=1 // pred_region
      _
    $region25: #{_mlp_apply.1} parent=1 // pred_fallthru
      _
    // Predicated region
    $region26: #{_mlp_apply.1} parent=1 // pred_check
      _
    $region27: #{_mlp_apply.1} parent=1 // pred_check_branch
      %35 = sbr.rel (0) target = $region29
    $region28: #{_mlp_apply.1} parent=1 // pred_region
      _
    $region29: #{_mlp_apply.1} parent=1 // pred_fallthru
      _
    // Predicated region
    $region30: #{_mlp_apply.1} parent=1 // pred_check
      _
    $region31: #{_mlp_apply.1} parent=1 // pred_check_branch
      %37 = sbr.rel (0) target = $region33
    $region32: #{_mlp_apply.1} parent=1 // pred_region
      %38 = dma.done [#allocation3], 128
    $region33: #{_mlp_apply.1} parent=1 // pred_fallthru
      _
    %v39 = vld [vmem:[#allocation2] sm:$0xff]
    %v40 = vld [vmem:[%s1] sm:$0xff]
    %v41 = vld [vmem:[%s1 + $0x8] sm:$0xff]
    %v42 = vld [vmem:[%s2] sm:$0x1]
    %v44 = vlaneseq
    %v45 = vshrl.u32 %v44, 7
    %v46 = vsub.s32 0, %v45
    %v47 = vrot.slane %v42, %v46
    %vm49 = vcmask 130048
    %v51 = vsel %vm49, %v39, 0
    %53 = vmatprep.subr.mxu0 0.0
    %54 = vmatpush1.msra.mxu0 %v40
    %55 = vmatprep.subr.mxu0 0.0
    %56 = vmatpush1.msra.mxu0 %v41
    %57 = vmatprep.subr.mxu0 0.0
    %58 = vmatpush1.msra.mxu0 0.0
    %59 = vmatprep.subr.mxu0 0.0
    %60 = vmatpush1.msra.mxu0 0.0
    %61 = vmatprep.subr.mxu0 0.0
    %62 = vmatpush1.msra.mxu0 0.0
    %63 = vmatprep.subr.mxu0 0.0
    %64 = vmatpush1.msra.mxu0 0.0
    %65 = vmatprep.subr.mxu0 0.0
    %66 = vmatpush1.msra.mxu0 0.0
    %67 = vmatprep.subr.mxu0 0.0
    %68 = vmatpush1.msra.mxu0 0.0
    %69 = vmatprep.subr.mxu0 0.0
    %70 = vmatpush1.msra.mxu0 0.0
    %71 = vmatprep.subr.mxu0 0.0
    %72 = vmatpush1.msra.mxu0 0.0
    %73 = vmatprep.subr.mxu0 0.0
    %74 = vmatpush1.msra.mxu0 0.0
    %75 = vmatprep.subr.mxu0 0.0
    %76 = vmatpush1.msra.mxu0 0.0
    %77 = vmatprep.subr.mxu0 0.0
    %78 = vmatpush1.msra.mxu0 0.0
    %79 = vmatprep.subr.mxu0 0.0
    %80 = vmatpush1.msra.mxu0 0.0
    %81 = vmatprep.subr.mxu0 0.0
    %82 = vmatpush1.msra.mxu0 0.0
    %83 = vmatprep.subr.mxu0 0.0
    %84 = vmatpush1.msra.mxu0 0.0
    %85 = vmatprep.subr.mxu0 0.0
    %86 = vmatpush1.msra.mxu0 0.0
    %87 = vmatprep.subr.mxu0 0.0
    %88 = vmatpush1.msra.mxu0 0.0
    %89 = vmatprep.subr.mxu0 0.0
    %90 = vmatpush1.msra.mxu0 0.0
    %91 = vmatprep.subr.mxu0 0.0
    %92 = vmatpush1.msra.mxu0 0.0
    %93 = vmatprep.subr.mxu0 0.0
    %94 = vmatpush1.msra.mxu0 0.0
    %95 = vmatprep.subr.mxu0 0.0
    %96 = vmatpush1.msra.mxu0 0.0
    %97 = vmatprep.subr.mxu0 0.0
    %98 = vmatpush1.msra.mxu0 0.0
    %99 = vmatprep.subr.mxu0 0.0
    %100 = vmatpush1.msra.mxu0 0.0
    %101 = vmatprep.subr.mxu0 0.0
    %102 = vmatpush1.msra.mxu0 0.0
    %103 = vmatprep.subr.mxu0 0.0
    %104 = vmatpush1.msra.mxu0 0.0
    %105 = vmatprep.subr.mxu0 0.0
    %106 = vmatpush1.msra.mxu0 0.0
    %107 = vmatprep.subr.mxu0 0.0
    %108 = vmatpush1.msra.mxu0 0.0
    %109 = vmatprep.subr.mxu0 0.0
    %110 = vmatpush1.msra.mxu0 0.0
    %111 = vmatprep.subr.mxu0 0.0
    %112 = vmatpush1.msra.mxu0 0.0
    %113 = vmatprep.subr.mxu0 0.0
    %114 = vmatpush1.msra.mxu0 0.0
    %115 = vmatprep.subr.mxu0 0.0
    %116 = vmatpush1.msra.mxu0 0.0
    %117 = vmatprep.mubr.f32.mxu0 0.0
    %118 = vmatmul.mubr.f32.gmra.mrb[0].mxu0 %v51
    %v119 = vpop.f32.mrb[0].mxu0
    %v120 = vadd.f32 %v47, %v119
    %v121 = vpop.f32.mrb[0].mxu0
    %122 = vdwg.mxu0
    %v123 = vtanh.pop %v120
    %v124 = vld [vmem:[%s3] sm:$0xff]
    %v125 = vld [vmem:[%s3 + $0x8] sm:$0xff]
    %v126 = vld [vmem:[%s3 + $0x10] sm:$0xff]
    %v127 = vld [vmem:[%s3 + $0x18] sm:$0xff]
    %v128 = vld [vmem:[%s4] sm:$0x1]
    %v130 = vlaneseq
    %v131 = vshrl.u32 %v130, 7
    %v132 = vsub.s32 0, %v131
    %v133 = vrot.slane %v128, %v132
    %vm135 = vcmask 261120
    %v137 = vsel %vm135, %v123, 0
    %139 = vmatprep.subr.mxu0 0.0
    %140 = vmatpush1.msra.mxu0 %v124
    %141 = vmatprep.subr.mxu0 0.0
    %142 = vmatpush1.msra.mxu0 %v125
    %143 = vmatprep.subr.mxu0 0.0
    %144 = vmatpush1.msra.mxu0 %v126
    %145 = vmatprep.subr.mxu0 0.0
    %146 = vmatpush1.msra.mxu0 %v127
    %147 = vmatprep.subr.mxu0 0.0
    %148 = vmatpush1.msra.mxu0 0.0
    %149 = vmatprep.subr.mxu0 0.0
    %150 = vmatpush1.msra.mxu0 0.0
    %151 = vmatprep.subr.mxu0 0.0
    %152 = vmatpush1.msra.mxu0 0.0
    %153 = vmatprep.subr.mxu0 0.0
    %154 = vmatpush1.msra.mxu0 0.0
    %155 = vmatprep.subr.mxu0 0.0
    %156 = vmatpush1.msra.mxu0 0.0
    %157 = vmatprep.subr.mxu0 0.0
    %158 = vmatpush1.msra.mxu0 0.0
    %159 = vmatprep.subr.mxu0 0.0
    %160 = vmatpush1.msra.mxu0 0.0
    %161 = vmatprep.subr.mxu0 0.0
    %162 = vmatpush1.msra.mxu0 0.0
    %163 = vmatprep.subr.mxu0 0.0
    %164 = vmatpush1.msra.mxu0 0.0
    %165 = vmatprep.subr.mxu0 0.0
    %166 = vmatpush1.msra.mxu0 0.0
    %167 = vmatprep.subr.mxu0 0.0
    %168 = vmatpush1.msra.mxu0 0.0
    %169 = vmatprep.subr.mxu0 0.0
    %170 = vmatpush1.msra.mxu0 0.0
    %171 = vmatprep.subr.mxu0 0.0
    %172 = vmatpush1.msra.mxu0 0.0
    %173 = vmatprep.subr.mxu0 0.0
    %174 = vmatpush1.msra.mxu0 0.0
    %175 = vmatprep.subr.mxu0 0.0
    %176 = vmatpush1.msra.mxu0 0.0
    %177 = vmatprep.subr.mxu0 0.0
    %178 = vmatpush1.msra.mxu0 0.0
    %179 = vmatprep.subr.mxu0 0.0
    %180 = vmatpush1.msra.mxu0 0.0
    %181 = vmatprep.subr.mxu0 0.0
    %182 = vmatpush1.msra.mxu0 0.0
    %183 = vmatprep.subr.mxu0 0.0
    %184 = vmatpush1.msra.mxu0 0.0
    %185 = vmatprep.subr.mxu0 0.0
    %186 = vmatpush1.msra.mxu0 0.0
    %187 = vmatprep.subr.mxu0 0.0
    %188 = vmatpush1.msra.mxu0 0.0
    %189 = vmatprep.subr.mxu0 0.0
    %190 = vmatpush1.msra.mxu0 0.0
    %191 = vmatprep.subr.mxu0 0.0
    %192 = vmatpush1.msra.mxu0 0.0
    %193 = vmatprep.subr.mxu0 0.0
    %194 = vmatpush1.msra.mxu0 0.0
    %195 = vmatprep.subr.mxu0 0.0
    %196 = vmatpush1.msra.mxu0 0.0
    %197 = vmatprep.subr.mxu0 0.0
    %198 = vmatpush1.msra.mxu0 0.0
    %199 = vmatprep.subr.mxu0 0.0
    %200 = vmatpush1.msra.mxu0 0.0
    %201 = vmatprep.subr.mxu0 0.0
    %202 = vmatpush1.msra.mxu0 0.0
    %203 = vmatprep.mubr.f32.mxu0 0.0
    %204 = vmatmul.mubr.f32.gmra.mrb[0].mxu0 %v137
    %v205 = vpop.f32.mrb[0].mxu0
    %v206 = vadd.f32 %v133, %v205
    %v207 = vpop.f32.mrb[0].mxu0
    %208 = vdwg.mxu0
    %v209 = vtanh.pop %v206
    %v210 = vld [vmem:[%s5] sm:$0xff]
    %v211 = vld [vmem:[%s5 + $0x8] sm:$0xff]
    %v212 = vld [vmem:[%s5 + $0x10] sm:$0xff]
    %v213 = vld [vmem:[%s5 + $0x18] sm:$0xff]
    %v214 = vld [vmem:[%s6] sm:$0x1]
    %v216 = vlaneseq
    %v217 = vshrl.u32 %v216, 7
    %v218 = vsub.s32 0, %v217
    %v219 = vrot.slane %v214, %v218
    %v222 = vsel %vm135, %v209, 0
    %224 = vmatprep.subr.mxu0 0.0
    %225 = vmatpush1.msra.mxu0 %v210
    %226 = vmatprep.subr.mxu0 0.0
    %227 = vmatpush1.msra.mxu0 %v211
    %228 = vmatprep.subr.mxu0 0.0
    %229 = vmatpush1.msra.mxu0 %v212
    %230 = vmatprep.subr.mxu0 0.0
    %231 = vmatpush1.msra.mxu0 %v213
    %232 = vmatprep.subr.mxu0 0.0
    %233 = vmatpush1.msra.mxu0 0.0
    %234 = vmatprep.subr.mxu0 0.0
    %235 = vmatpush1.msra.mxu0 0.0
    %236 = vmatprep.subr.mxu0 0.0
    %237 = vmatpush1.msra.mxu0 0.0
    %238 = vmatprep.subr.mxu0 0.0
    %239 = vmatpush1.msra.mxu0 0.0
    %240 = vmatprep.subr.mxu0 0.0
    %241 = vmatpush1.msra.mxu0 0.0
    %242 = vmatprep.subr.mxu0 0.0
    %243 = vmatpush1.msra.mxu0 0.0
    %244 = vmatprep.subr.mxu0 0.0
    %245 = vmatpush1.msra.mxu0 0.0
    %246 = vmatprep.subr.mxu0 0.0
    %247 = vmatpush1.msra.mxu0 0.0
    %248 = vmatprep.subr.mxu0 0.0
    %249 = vmatpush1.msra.mxu0 0.0
    %250 = vmatprep.subr.mxu0 0.0
    %251 = vmatpush1.msra.mxu0 0.0
    %252 = vmatprep.subr.mxu0 0.0
    %253 = vmatpush1.msra.mxu0 0.0
    %254 = vmatprep.subr.mxu0 0.0
    %255 = vmatpush1.msra.mxu0 0.0
    %256 = vmatprep.subr.mxu0 0.0
    %257 = vmatpush1.msra.mxu0 0.0
    %258 = vmatprep.subr.mxu0 0.0
    %259 = vmatpush1.msra.mxu0 0.0
    %260 = vmatprep.subr.mxu0 0.0
    %261 = vmatpush1.msra.mxu0 0.0
    %262 = vmatprep.subr.mxu0 0.0
    %263 = vmatpush1.msra.mxu0 0.0
    %264 = vmatprep.subr.mxu0 0.0
    %265 = vmatpush1.msra.mxu0 0.0
    %266 = vmatprep.subr.mxu0 0.0
    %267 = vmatpush1.msra.mxu0 0.0
    %268 = vmatprep.subr.mxu0 0.0
    %269 = vmatpush1.msra.mxu0 0.0
    %270 = vmatprep.subr.mxu0 0.0
    %271 = vmatpush1.msra.mxu0 0.0
    %272 = vmatprep.subr.mxu0 0.0
    %273 = vmatpush1.msra.mxu0 0.0
    %274 = vmatprep.subr.mxu0 0.0
    %275 = vmatpush1.msra.mxu0 0.0
    %276 = vmatprep.subr.mxu0 0.0
    %277 = vmatpush1.msra.mxu0 0.0
    %278 = vmatprep.subr.mxu0 0.0
    %279 = vmatpush1.msra.mxu0 0.0
    %280 = vmatprep.subr.mxu0 0.0
    %281 = vmatpush1.msra.mxu0 0.0
    %282 = vmatprep.subr.mxu0 0.0
    %283 = vmatpush1.msra.mxu0 0.0
    %284 = vmatprep.subr.mxu0 0.0
    %285 = vmatpush1.msra.mxu0 0.0
    %286 = vmatprep.subr.mxu0 0.0
    %287 = vmatpush1.msra.mxu0 0.0
    %288 = vmatprep.mubr.f32.mxu0 0.0
    %289 = vmatmul.mubr.f32.gmra.mrb[0].mxu0 %v222
    %v290 = vpop.f32.mrb[0].mxu0
    %v291 = vadd.f32 %v219, %v290
    %v292 = vpop.f32.mrb[0].mxu0
    %293 = vdwg.mxu0
    %vm294 = vcmask 64512
    %295 = vst.msk [vmem:[#allocation5] sm:$0xff] %vm294, %v291
    // Predicated region
    $region34: #{_mlp_apply.1} parent=1 // pred_check
      _
    $region35: #{_mlp_apply.1} parent=1 // pred_check_branch
      %297 = sbr.rel (0) target = $region37
    $region36: #{_mlp_apply.1} parent=1 // pred_region
      %s299 = ssub.s32 128, 128
      %300 = vsyncadd [#allocation4], %s299
      %s302 = sshll.u32 [#allocation5], 4
      %s303 = int_to_ptr.vmem [resolvable:$true] %s302
      %305 = dma.vmem_to_hbm [thread:$0]  %s303, 128, %s7, [#allocation4]
    $region37: #{_mlp_apply.1} parent=1 // pred_fallthru
      _
    // Predicated region
    $region38: #{_mlp_apply.1} parent=1 // pred_check
      _
    $region39: #{_mlp_apply.1} parent=1 // pred_check_branch
      %307 = sbr.rel (0) target = $region41
    $region40: #{_mlp_apply.1} parent=1 // pred_region
      %308 = dma.done [#allocation4], 128
    $region41: #{_mlp_apply.1} parent=1 // pred_fallthru
      _
    %309 = vsyncpa [#allocation3], 1
    %310 = vsyncpa [#allocation4], 1

</llo_original>
